<compile_context>
chip_gen: v7x
topology: tpu7x:2x2x1
jax: 0.10.0
libtpu: 0.0.40
codegen_flags: <defaults>
</compile_context>

<pallas_src>
import math

import jax
import jax.numpy as jnp
from jax.experimental import pallas as pl
from jax.experimental.pallas import tpu as pltpu

_LANE = 128      # TPU vreg lane width (last dim)


def _round_up(x, m):
    return ((x + m - 1) // m) * m


# ----------------------------------------------------------------------------
# Pallas kernels
# ----------------------------------------------------------------------------
def _wa_kernel(p_ref, cnn_ref, sx_ref, o_ref):
    # out = p*cnn + (1-p)*sx  ==  sx + p*(cnn - sx)   (one vmul saved per vreg)
    p = p_ref[0]
    cnn = cnn_ref[...].astype(jnp.float32)
    sx = sx_ref[...].astype(jnp.float32)
    o_ref[...] = (sx + p * (cnn - sx)).astype(o_ref.dtype)


def _wa_residual_kernel(p_ref, res_ref, cnn_ref, sx_ref, o_ref):
    # out = p*(res+cnn) + (1-p)*sx  ==  sx + p*(res + cnn - sx)
    p = p_ref[0]
    res = res_ref[...].astype(jnp.float32)
    cnn = cnn_ref[...].astype(jnp.float32)
    sx = sx_ref[...].astype(jnp.float32)
    o_ref[...] = (sx + p * (res + cnn - sx)).astype(o_ref.dtype)


# ----------------------------------------------------------------------------
# Wrapper
# ----------------------------------------------------------------------------
def weighted_average(para, cnn, Sx, residual=None, *, max_block_rows=4096):
    """weightedAverageTerm.forward: para * cnn + (1 - para) * Sx.

    If `residual` is given, computes para * (residual + cnn) + (1 - para) * Sx
    with the add fused inside the kernel (no extra HBM round trip).
    """
    assert cnn.shape == Sx.shape
    if residual is not None:
        assert residual.shape == cnn.shape
    shape, dtype = cnn.shape, cnn.dtype
    n = math.prod(shape)

    # Sublane packing depends on dtype (f32: 8, bf16/f16: 16, int8/fp8: 32).
    itemsize = jnp.dtype(dtype).itemsize
    sublane_pack = max(8, 32 // max(1, itemsize))
    max_block_rows = max(sublane_pack, _round_up(max_block_rows, sublane_pack))

    aligned = (n % _LANE == 0)
    rows = n // _LANE if aligned else -(-n // _LANE)

    def to2d(x):
        flat = x.reshape(-1)
        if not aligned:
            # Ragged tail only: pad to the next 128-multiple (<128 extra elems).
            flat = jnp.pad(flat, (0, rows * _LANE - n))
        return flat.reshape(rows, _LANE)

    # Full-extent block for small tensors (always a legal block shape); for big
    # tensors a packing-aligned 4096-row tile — Pallas masks the partial last
    # block, so `rows` is never rounded up to a tile multiple.
    block_rows = rows if rows <= max_block_rows else max_block_rows
    grid = (pl.cdiv(rows, block_rows),)
    # TODO(synk): on v7x, verify via xprof that >=2-step "parallel" grids land
    # on both TensorCores; otherwise switch to an explicit core split.

    para = jnp.asarray(para, jnp.float32).reshape(1)
    tensors = [cnn] if residual is None else [residual, cnn]
    tensors = [to2d(t) for t in tensors + [Sx]]
    kernel = _wa_kernel if residual is None else _wa_residual_kernel

    block = pl.BlockSpec((block_rows, _LANE), lambda i: (i, 0))
    out = pl.pallas_call(
        kernel,
        out_shape=jax.ShapeDtypeStruct((rows, _LANE), dtype),
        grid=grid,
        in_specs=[pl.BlockSpec(memory_space=pltpu.MemorySpace.SMEM)]
                 + [block] * len(tensors),
        out_specs=block,
        compiler_params=pltpu.CompilerParams(
            dimension_semantics=("parallel",),
            vmem_limit_bytes=32 * 1024 * 1024),
    )(para, *tensors)

    if aligned:
        return out.reshape(shape)          # pure reshape, zero-copy
    return out.reshape(-1)[:n].reshape(shape)


# ----------------------------------------------------------------------------
# Main
# ----------------------------------------------------------------------------
if __name__ == "__main__":
    key = jax.random.PRNGKey(0)
    k1, k2, k3, k4, k5 = jax.random.split(key, 5)

    para = jnp.array([0.1], jnp.float32)   # torch.nn.Parameter(torch.Tensor([0.1]))

    # NCHW tensors, as produced by the surrounding KD_knee network.
    cnn = jax.random.normal(k1, (2, 4, 16, 16), jnp.float32)
    Sx = jax.random.normal(k2, (2, 4, 16, 16), jnp.float32)

    fwd = jax.jit(weighted_average)
    out = jax.block_until_ready(fwd(para, cnn, Sx))
    ref = para[0] * cnn + (1.0 - para[0]) * Sx
    assert out.shape == cnn.shape
    assert bool(jnp.all(jnp.isfinite(out)))
    assert jnp.allclose(out, ref, atol=1e-6, rtol=1e-6)

    # Ragged total size (exercises the <128-element lane-tail pad path).
    a = jax.random.normal(k3, (3, 5, 7, 9), jnp.float32)
    b = jax.random.normal(k4, (3, 5, 7, 9), jnp.float32)
    out2 = jax.block_until_ready(fwd(para, a, b))
    ref2 = para[0] * a + (1.0 - para[0]) * b
    assert jnp.allclose(out2, ref2, atol=1e-6, rtol=1e-6)

    # Fused-residual variant: para * (res + cnn) + (1 - para) * Sx.
    res = jax.random.normal(k5, (2, 4, 16, 16), jnp.float32)
    out3 = jax.block_until_ready(jax.jit(weighted_average)(para, cnn, Sx, res))
    ref3 = para[0] * (res + cnn) + (1.0 - para[0]) * Sx
    assert jnp.allclose(out3, ref3, atol=1e-6, rtol=1e-6)

    # bf16 path (exercises dtype-aware sublane packing / in-register upcast).
    out4 = jax.block_until_ready(fwd(para, cnn.astype(jnp.bfloat16),
                                     Sx.astype(jnp.bfloat16)))
    assert out4.dtype == jnp.bfloat16
    assert jnp.allclose(out4.astype(jnp.float32), ref, atol=2e-2, rtol=2e-2)

    print("KERNEL_OK")
</pallas_src>

<mosaic_0001>
module attributes {stable_mosaic.version = 11 : i64} {
  func.func @_wa_kernel(%arg0: i32, %arg1: memref<1xf32, #tpu.memory_space<smem>>, %arg2: memref<16x128xf32, #tpu.memory_space<vmem>>, %arg3: memref<16x128xf32, #tpu.memory_space<vmem>>, %arg4: memref<16x128xf32, #tpu.memory_space<vmem>>) attributes {dimension_semantics = [#tpu.dimension_semantics<parallel>], iteration_bounds = array<i64: 1>, scalar_prefetch = 0 : i64, scratch_operands = 0 : i64, tpu.core_type = #tpu.core_type<tc>, window_params = [{transform_indices = @transform_0, window_bounds = array<i64: 1>}, {transform_indices = @transform_1, window_bounds = array<i64: 16, 128>}, {transform_indices = @transform_2, window_bounds = array<i64: 16, 128>}, {transform_indices = @transform_3, window_bounds = array<i64: 16, 128>}]} {
    %c0 = arith.constant 0 : index
    %0 = memref.load %arg1[%c0] : memref<1xf32, #tpu.memory_space<smem>>
    %c0_0 = arith.constant 0 : index
    %c0_1 = arith.constant 0 : index
    %1 = vector.load %arg2[%c0_0, %c0_1] : memref<16x128xf32, #tpu.memory_space<vmem>>, vector<16x128xf32>
    %c0_2 = arith.constant 0 : index
    %c0_3 = arith.constant 0 : index
    %2 = vector.load %arg3[%c0_2, %c0_3] : memref<16x128xf32, #tpu.memory_space<vmem>>, vector<16x128xf32>
    %3 = arith.subf %1, %2 : vector<16x128xf32>
    %4 = vector.broadcast %0 : f32 to vector<16x128xf32>
    %5 = arith.mulf %4, %3 : vector<16x128xf32>
    %6 = arith.addf %2, %5 : vector<16x128xf32>
    %c0_4 = arith.constant 0 : index
    %c0_5 = arith.constant 0 : index
    %7 = vector.load %arg4[%c0_4, %c0_5] : memref<16x128xf32, #tpu.memory_space<vmem>>, vector<16x128xf32>
    tpu.vector_store %arg4[%c0_4, %c0_5], %6 {strides = array<i32>} : memref<16x128xf32, #tpu.memory_space<vmem>>, vector<16x128xf32>,
    return
  }
  func.func @transform_0(%arg0: i32) -> i32 {
    %c0_i32 = arith.constant 0 : i32
    %c0_i32_0 = arith.constant 0 : i32
    return %c0_i32 : i32
  }
  func.func @transform_1(%arg0: i32) -> (i32, i32) {
    %c0_i32 = arith.constant 0 : i32
    %c0_i32_0 = arith.constant 0 : i32
    return %arg0, %c0_i32 : i32, i32
  }
  func.func @transform_2(%arg0: i32) -> (i32, i32) {
    %c0_i32 = arith.constant 0 : i32
    %c0_i32_0 = arith.constant 0 : i32
    return %arg0, %c0_i32 : i32, i32
  }
  func.func @transform_3(%arg0: i32) -> (i32, i32) {
    %c0_i32 = arith.constant 0 : i32
    %c0_i32_0 = arith.constant 0 : i32
    return %arg0, %c0_i32 : i32, i32
  }
}

</mosaic_0001>

<llo_original>
// kernel: weighted_average.1
$region0: #{weighted_average.1}
  #allocation0 [shape = 'u32[]', space=smem, size = 0x4, offset = 0x4, fixed_abs, tag = 'smem constant byte address 0x4 - core index']
  #allocation1 [shape = 'u32[144,128]{1,0:T(1,128)}', space=vmem, size = 0x12000, scoped, tag = 'internal scratch']
  #allocation2 [shape = 'f32[1]{0:T(128)S(6)}', space=smem, size = 0x200, scoped, tag = 'scoped memory for weighted_average.1']
  %s0 = inlined_call_operand.<no memory space> [shape: f32[1], index: 0, kind: input, shape index: {}]
  %s1 = inlined_call_operand.vmem [shape: f32[16,128], index: 1, kind: input, shape index: {}]
  %s2 = inlined_call_operand.vmem [shape: f32[16,128], index: 2, kind: input, shape index: {}]
  %s3 = inlined_call_operand.vmem [shape: f32[16,128], index: 3, kind: output, shape index: {}]
  %s4 = sld [smem:[#allocation0]]
  $region22: #{weighted_average.1} parent=0
    _
  %s6 = ssub.s32 1, %s4
  %s7 = scalar_select 0, %s6, %s4
  %8 = sst [smem:[#allocation2]] %s0
  // Predicated region
  $region2: #{weighted_average.1} parent=0 // pred_check
    _
  $region3: #{weighted_average.1} parent=0 // pred_check_branch
    %10 = sbr.rel (0) target = $region5
  $region4: #{weighted_average.1} parent=0 // pred_region
    _
  $region5: #{weighted_average.1} parent=0 // pred_fallthru
    _
  // Predicated region
  $region6: #{weighted_average.1} parent=0 // pred_check
    _
  $region7: #{weighted_average.1} parent=0 // pred_check_branch
    %12 = sbr.rel (0) target = $region9
  $region8: #{weighted_average.1} parent=0 // pred_region
    _
  $region9: #{weighted_average.1} parent=0 // pred_fallthru
    _
  // Predicated region
  $region10: #{weighted_average.1} parent=0 // pred_check
    _
  $region11: #{weighted_average.1} parent=0 // pred_check_branch
    %14 = sbr.rel (0) target = $region13
  $region12: #{weighted_average.1} parent=0 // pred_region
    _
  $region13: #{weighted_average.1} parent=0 // pred_fallthru
    _
  %s15 = sld [smem:[#allocation2]]
  %v16 = vld [vmem:[%s1] sm:$0xff]
  %v17 = vld [vmem:[%s1 + $0x8] sm:$0xff]
  %v18 = vld [vmem:[%s2] sm:$0xff]
  %v19 = vld [vmem:[%s2 + $0x8] sm:$0xff]
  %v20 = vsub.f32 %v16, %v18
  %v21 = vsub.f32 %v17, %v19
  %v22 = vstv %s15
  %v23 = vmul.f32 %v22, %v20
  %v24 = vmul.f32 %v22, %v21
  %v25 = vadd.f32 %v18, %v23
  %v26 = vadd.f32 %v19, %v24
  %27 = vst [vmem:[%s3] sm:$0xff] %v25
  %28 = vst [vmem:[%s3 + $0x8] sm:$0xff] %v26
  // Predicated region
  $region14: #{weighted_average.1} parent=0 // pred_check
    _
  $region15: #{weighted_average.1} parent=0 // pred_check_branch
    %30 = sbr.rel (0) target = $region17
  $region16: #{weighted_average.1} parent=0 // pred_region
    _
  $region17: #{weighted_average.1} parent=0 // pred_fallthru
    _
  // Predicated region
  $region18: #{weighted_average.1} parent=0 // pred_check
    _
  $region19: #{weighted_average.1} parent=0 // pred_check_branch
    %32 = sbr.rel (0) target = $region21
  $region20: #{weighted_average.1} parent=0 // pred_region
    _
  $region21: #{weighted_average.1} parent=0 // pred_fallthru
    _

</llo_original>
